<compile_context>
chip_gen: v7x
topology: tpu7x:2x2x1
jax: 0.10.0
libtpu: 0.0.40
codegen_flags: <defaults>
</compile_context>

<pallas_src>
import functools

import jax
import jax.numpy as jnp
from jax.experimental import pallas as pl
from jax.experimental.pallas import tpu as pltpu


def _pick_batch_chunk(batch):
    """Largest 'nice' divisor of batch that still yields >= 2 chunks so the
    HBM fill of chunk c+1 overlaps pass-1 compute on chunk c."""
    for bc in (8, 4, 2, 1):
        if batch % bc == 0 and batch // bc >= 2:
            return bc
    return batch


def _attention_filtration_kernel(
    params_ref,   # SMEM f32[3] = [linear_bias, bn_gamma, bn_beta]
    x_hbm,        # ANY/HBM f32[B, L, D]  (sim_emb; DMA'd manually in chunks)
    w_ref,        # VMEM f32[1, 1, D]     (Linear(D->1) weight)
    out_ref,      # VMEM f32[B, D]        (sim_saf, dense output)
    x_vmem,       # VMEM f32[B, L, D]     scratch: resident copy of x
    s_ref,        # VMEM f32[B, L]        scratch: scores, then reused as attn
    sem,          # DMA semaphores, one per chunk
    *,
    bc,           # batch rows per chunk (divides B)
    n_chunks,     # B // bc
):
    B, L, D = x_vmem.shape
    lin_b = params_ref[0]
    gamma = params_ref[1]
    beta = params_ref[2]
    w = w_ref[...]                                   # (1, 1, D), broadcasts over chunks

    def chunk_dma(c):
        off = c * bc
        return pltpu.make_async_copy(
            x_hbm.at[pl.ds(off, bc), :, :],
            x_vmem.at[pl.ds(off, bc), :, :],
            sem.at[c],
        )

    # Prime the pipeline: chunk 0 in flight before any compute.
    chunk_dma(0).start()

    # ---- Pass 1 (overlapped with the HBM fill): Linear(D -> 1) as an exact ----
    # f32 VPU lane multiply + reduce. scores kept dense as (B, L).
    @pl.loop(0, n_chunks)
    def _(c):
        chunk_dma(c).wait()

        @pl.when(c + 1 < n_chunks)
        def _():
            chunk_dma(c + 1).start()

        off = c * bc
        xc = x_vmem[pl.ds(off, bc), :, :]                      # (bc, L, D)
        s_ref[pl.ds(off, bc), :] = jnp.sum(xc * w, axis=-1) + lin_b   # (bc, L)

    # ---- BatchNorm1d(1), training mode: stats over all B*L scores ----
    scores = s_ref[...]                                         # (B, L)
    inv_n = 1.0 / (B * L)
    mean = jnp.sum(scores) * inv_n                              # single sum reused
    centered = scores - mean
    var = jnp.sum(centered * centered) * inv_n                  # biased variance
    bn = centered * (jax.lax.rsqrt(var + 1e-5) * gamma) + beta

    # ---- sigmoid + l1norm over L (sigmoid > 0, so torch's abs() drops) ----
    sig = pl.reciprocal(1.0 + jnp.exp(-bn), approx=False)       # (B, L)
    l1 = jnp.sum(sig, axis=-1, keepdims=True) + 1e-8            # (B, 1)
    s_ref[...] = sig * pl.reciprocal(l1, approx=False)          # attn, reuse scratch

    # ---- Pass 2: weighted aggregation + l2norm, chunked over B, reading ----
    # the VMEM-resident x (no second HBM read). Result rows written straight
    # into the dense (B, D) output.
    @pl.loop(0, n_chunks)
    def _(c):
        off = c * bc
        attn_c = s_ref[pl.ds(off, bc), :]                       # (bc, L)
        xc = x_vmem[pl.ds(off, bc), :, :]                       # (bc, L, D)
        saf = jnp.einsum(
            "bql,bld->bqd", attn_c[:, None, :], xc,
            preferred_element_type=jnp.float32,
            precision=jax.lax.Precision.HIGHEST,
        )                                                        # (bc, 1, D)
        nrm = jnp.sqrt(jnp.sum(saf * saf, axis=-1, keepdims=True)) + 1e-8
        out_ref[pl.ds(off, bc), :] = (saf * pl.reciprocal(nrm, approx=False))[:, 0, :]


def attention_filtration(sim_emb, lin_w, lin_b, bn_gamma, bn_beta):
    """sim_emb: (B, L, D) f32; lin_w: (D,) f32; scalars lin_b, bn_gamma, bn_beta."""
    B, L, D = sim_emb.shape
    params = jnp.asarray([lin_b, bn_gamma, bn_beta], dtype=jnp.float32)
    w3 = lin_w.reshape(1, 1, D).astype(jnp.float32)
    x = sim_emb.astype(jnp.float32)

    bc = _pick_batch_chunk(B)
    n_chunks = B // bc

    # ---- Generation-aware scoped-VMEM budget -------------------------------
    def _ceil(a, m):
        return (a + m - 1) // m * m

    x_bytes = B * _ceil(L, 8) * _ceil(D, 128) * 4          # padded resident copy
    need = int(1.5 * x_bytes) + (2 << 20)                  # + scores/out/w/margin
    try:
        cap = int(pltpu.get_tpu_info().vmem_capacity_bytes)
    except Exception:                                      # pragma: no cover
        cap = 64 * 1024 * 1024                             # conservative (v7x)
    headroom = max(8 << 20, cap // 8)                      # leave room for Mosaic scratch
    vmem_limit = int(min(max(need, 16 << 20), cap - headroom))

    cost = pl.CostEstimate(
        flops=4 * B * L * D,                 # two contractions over x
        transcendentals=B * L,               # sigmoid exp
        bytes_accessed=4 * (B * L * D + D + B * D),
    )

    kernel = functools.partial(_attention_filtration_kernel, bc=bc, n_chunks=n_chunks)

    return pl.pallas_call(
        kernel,
        out_shape=jax.ShapeDtypeStruct((B, D), jnp.float32),
        in_specs=[
            pl.BlockSpec(memory_space=pltpu.MemorySpace.SMEM),   # params (scalars)
            pl.BlockSpec(memory_space=pl.ANY),                   # x stays in HBM
            pl.BlockSpec(memory_space=pltpu.MemorySpace.VMEM),   # w
        ],
        out_specs=pl.BlockSpec(memory_space=pltpu.MemorySpace.VMEM),
        scratch_shapes=[
            pltpu.VMEM((B, L, D), jnp.float32),    # resident copy of x
            pltpu.VMEM((B, L), jnp.float32),       # scores -> attn
            pltpu.SemaphoreType.DMA((n_chunks,)),  # per-chunk DMA completion
        ],
        compiler_params=pltpu.CompilerParams(vmem_limit_bytes=vmem_limit),
        cost_estimate=cost,
    )(params, x, w3)


def _reference(sim_emb, lin_w, lin_b, bn_gamma, bn_beta):
    """Pure-JAX reference mirroring the PyTorch forward (training-mode BN)."""
    hp = jax.lax.Precision.HIGHEST
    scores = jnp.einsum("bld,d->bl", sim_emb, lin_w, precision=hp) + lin_b
    mean = jnp.mean(scores)
    var = jnp.mean((scores - mean) ** 2)
    bn = (scores - mean) / jnp.sqrt(var + 1e-5) * bn_gamma + bn_beta
    sig = jax.nn.sigmoid(bn)
    attn = sig / (jnp.sum(jnp.abs(sig), axis=-1, keepdims=True) + 1e-8)
    saf = jnp.einsum("bl,bld->bd", attn, sim_emb, precision=hp)
    return saf / (jnp.sqrt(jnp.sum(saf ** 2, axis=-1, keepdims=True)) + 1e-8)


if __name__ == "__main__":
    # Shapes consistent with the module: (batch, L+1, sim_dim=256).
    # sim_dim=256 is the production value and is lane-dense (2 x 128 lanes).
    B, L, D = 2, 8, 256
    key = jax.random.PRNGKey(0)
    k_x, k_w = jax.random.split(key)

    sim_emb = jax.random.normal(k_x, (B, L, D), dtype=jnp.float32)

    # Deterministic parameter init mirroring init_weights():
    #   Linear: uniform(-r, r) with r = sqrt(6)/sqrt(in + out), bias = 0
    #   BatchNorm1d: gamma = 1, beta = 0
    r = (6.0 ** 0.5) / ((D + 1) ** 0.5)
    lin_w = jax.random.uniform(k_w, (D,), minval=-r, maxval=r, dtype=jnp.float32)
    lin_b = jnp.float32(0.0)
    bn_gamma = jnp.float32(1.0)
    bn_beta = jnp.float32(0.0)

    out = attention_filtration(sim_emb, lin_w, lin_b, bn_gamma, bn_beta)
    out = jax.block_until_ready(out)

    ref = _reference(sim_emb, lin_w, lin_b, bn_gamma, bn_beta)
    assert out.shape == (B, D)
    assert jnp.allclose(out, ref, atol=2e-5, rtol=2e-5), "mismatch vs reference"

    print("KERNEL_OK")
</pallas_src>

<mosaic_0001>
module attributes {stable_mosaic.version = 11 : i64} {
  func.func @_attention_filtration_kernel(%arg0: memref<3xf32, #tpu.memory_space<smem>>, %arg1: memref<2x8x256xf32, #tpu.memory_space<any>>, %arg2: memref<1x1x256xf32, #tpu.memory_space<vmem>>, %arg3: memref<2x256xf32, #tpu.memory_space<vmem>>, %arg4: memref<2x8x256xf32, #tpu.memory_space<vmem>>, %arg5: memref<2x8xf32, #tpu.memory_space<vmem>>, %arg6: memref<2x!tpu.dma_semaphore, #tpu.memory_space<semaphore_mem>>) attributes {dimension_semantics = [], scalar_prefetch = 0 : i64, scratch_operands = 3 : i64, tpu.core_type = #tpu.core_type<tc>} {
    %c0 = arith.constant 0 : index
    %0 = memref.load %arg0[%c0] : memref<3xf32, #tpu.memory_space<smem>>
    %c1 = arith.constant 1 : index
    %1 = memref.load %arg0[%c1] : memref<3xf32, #tpu.memory_space<smem>>
    %c2 = arith.constant 2 : index
    %2 = memref.load %arg0[%c2] : memref<3xf32, #tpu.memory_space<smem>>
    %c0_0 = arith.constant 0 : index
    %c0_1 = arith.constant 0 : index
    %c0_2 = arith.constant 0 : index
    %3 = vector.load %arg2[%c0_0, %c0_1, %c0_2] : memref<1x1x256xf32, #tpu.memory_space<vmem>>, vector<1x1x256xf32>
    %c0_i32 = arith.constant 0 : i32
    %c0_i32_3 = arith.constant 0 : i32
    %c0_i32_4 = arith.constant 0 : i32
    %c0_i32_5 = arith.constant 0 : i32
    %4 = tpu.memref_slice %arg1[%c0_i32_3, %c0_i32_4, %c0_i32_5] : memref<2x8x256xf32, #tpu.memory_space<any>> -> memref<1x8x256xf32, #tpu.memory_space<any>>
    %c0_i32_6 = arith.constant 0 : i32
    %c0_i32_7 = arith.constant 0 : i32
    %c0_i32_8 = arith.constant 0 : i32
    %5 = tpu.memref_slice %arg4[%c0_i32_6, %c0_i32_7, %c0_i32_8] : memref<2x8x256xf32, #tpu.memory_space<vmem>> -> memref<1x8x256xf32, #tpu.memory_space<vmem>>
    %6 = tpu.memref_slice %arg6[%c0_i32] : memref<2x!tpu.dma_semaphore, #tpu.memory_space<semaphore_mem>> -> memref<1x!tpu.dma_semaphore, #tpu.memory_space<semaphore_mem>>
    %7 = tpu.memref_squeeze %6 : memref<1x!tpu.dma_semaphore, #tpu.memory_space<semaphore_mem>> -> memref<!tpu.dma_semaphore, #tpu.memory_space<semaphore_mem>>
    tpu.enqueue_dma source(%4 : memref<1x8x256xf32, #tpu.memory_space<any>>) target(%5 : memref<1x8x256xf32, #tpu.memory_space<vmem>>) target_semaphore(%7 : memref<!tpu.dma_semaphore, #tpu.memory_space<semaphore_mem>>)
    %c0_i32_9 = arith.constant 0 : i32
    %c2_i32 = arith.constant 2 : i32
    %8 = arith.addi %c0_i32_9, %c2_i32 : i32
    %c1_i32 = arith.constant 1 : i32
    scf.for %arg7 = %c0_i32_9 to %8 step %c1_i32  : i32 {
      %c1_i32_27 = arith.constant 1 : i32
      %45 = arith.muli %arg7, %c1_i32_27 : i32
      %c0_i32_28 = arith.constant 0 : i32
      %46 = arith.addi %c0_i32_28, %45 : i32
      %c1_i32_29 = arith.constant 1 : i32
      %47 = arith.muli %46, %c1_i32_29 : i32
      %c0_i32_30 = arith.constant 0 : i32
      %c0_i32_31 = arith.constant 0 : i32
      %48 = tpu.memref_slice %arg1[%47, %c0_i32_30, %c0_i32_31] : memref<2x8x256xf32, #tpu.memory_space<any>> -> memref<1x8x256xf32, #tpu.memory_space<any>>
      %c0_i32_32 = arith.constant 0 : i32
      %c0_i32_33 = arith.constant 0 : i32
      %49 = tpu.memref_slice %arg4[%47, %c0_i32_32, %c0_i32_33] : memref<2x8x256xf32, #tpu.memory_space<vmem>> -> memref<1x8x256xf32, #tpu.memory_space<vmem>>
      %50 = tpu.memref_slice %arg6[%46] : memref<2x!tpu.dma_semaphore, #tpu.memory_space<semaphore_mem>> -> memref<1x!tpu.dma_semaphore, #tpu.memory_space<semaphore_mem>>
      %51 = tpu.memref_squeeze %50 : memref<1x!tpu.dma_semaphore, #tpu.memory_space<semaphore_mem>> -> memref<!tpu.dma_semaphore, #tpu.memory_space<semaphore_mem>>
      tpu.wait_dma2 semaphore(%51 : memref<!tpu.dma_semaphore, #tpu.memory_space<semaphore_mem>>) src(%48 : memref<1x8x256xf32, #tpu.memory_space<any>>) dst(%49 : memref<1x8x256xf32, #tpu.memory_space<vmem>>)
      %c1_i32_34 = arith.constant 1 : i32
      %52 = arith.addi %46, %c1_i32_34 : i32
      %c2_i32_35 = arith.constant 2 : i32
      %53 = arith.cmpi slt, %52, %c2_i32_35 : i32
      %54 = arith.extui %53 : i1 to i32
      %c0_i32_36 = arith.constant 0 : i32
      %55 = arith.cmpi ne, %54, %c0_i32_36 : i32
      scf.if %55 {
        %c1_i32_42 = arith.constant 1 : i32
        %66 = arith.addi %46, %c1_i32_42 : i32
        %c1_i32_43 = arith.constant 1 : i32
        %67 = arith.muli %66, %c1_i32_43 : i32
        %c0_i32_44 = arith.constant 0 : i32
        %c0_i32_45 = arith.constant 0 : i32
        %68 = tpu.memref_slice %arg1[%67, %c0_i32_44, %c0_i32_45] : memref<2x8x256xf32, #tpu.memory_space<any>> -> memref<1x8x256xf32, #tpu.memory_space<any>>
        %c0_i32_46 = arith.constant 0 : i32
        %c0_i32_47 = arith.constant 0 : i32
        %69 = tpu.memref_slice %arg4[%67, %c0_i32_46, %c0_i32_47] : memref<2x8x256xf32, #tpu.memory_space<vmem>> -> memref<1x8x256xf32, #tpu.memory_space<vmem>>
        %70 = tpu.memref_slice %arg6[%66] : memref<2x!tpu.dma_semaphore, #tpu.memory_space<semaphore_mem>> -> memref<1x!tpu.dma_semaphore, #tpu.memory_space<semaphore_mem>>
        %71 = tpu.memref_squeeze %70 : memref<1x!tpu.dma_semaphore, #tpu.memory_space<semaphore_mem>> -> memref<!tpu.dma_semaphore, #tpu.memory_space<semaphore_mem>>
        tpu.enqueue_dma source(%68 : memref<1x8x256xf32, #tpu.memory_space<any>>) target(%69 : memref<1x8x256xf32, #tpu.memory_space<vmem>>) target_semaphore(%71 : memref<!tpu.dma_semaphore, #tpu.memory_space<semaphore_mem>>)
      } else {
      }
      %c1_i32_37 = arith.constant 1 : i32
      %56 = arith.muli %46, %c1_i32_37 : i32
      %57 = arith.index_cast %56 : i32 to index
      %c0_38 = arith.constant 0 : index
      %c0_39 = arith.constant 0 : index
      %58 = vector.load %arg4[%57, %c0_38, %c0_39] : memref<2x8x256xf32, #tpu.memory_space<vmem>>, vector<1x8x256xf32>
      %59 = vector.broadcast %3 : vector<1x1x256xf32> to vector<1x8x256xf32>
      %60 = arith.mulf %58, %59 : vector<1x8x256xf32>
      %cst_40 = arith.constant dense<0.000000e+00> : vector<1x8xf32>
      %61 = vector.multi_reduction <add>, %60, %cst_40 [2] : vector<1x8x256xf32> to vector<1x8xf32>
      %62 = vector.broadcast %0 : f32 to vector<1x8xf32>
      %63 = arith.addf %61, %62 : vector<1x8xf32>
      %64 = arith.index_cast %56 : i32 to index
      %c0_41 = arith.constant 0 : index
      %65 = vector.load %arg5[%64, %c0_41] : memref<2x8xf32, #tpu.memory_space<vmem>>, vector<1x8xf32>
      tpu.vector_store %arg5[%64, %c0_41], %63 {strides = array<i32>} : memref<2x8xf32, #tpu.memory_space<vmem>>, vector<1x8xf32>,
    }
    %c2_i32_10 = arith.constant 2 : i32
    %c0_11 = arith.constant 0 : index
    %c0_12 = arith.constant 0 : index
    %9 = vector.load %arg5[%c0_11, %c0_12] : memref<2x8xf32, #tpu.memory_space<vmem>>, vector<2x8xf32>
    %10 = vector.shape_cast %9 : vector<2x8xf32> to vector<1x2x8xf32>
    %cst = arith.constant dense<0.000000e+00> : vector<1xf32>
    %11 = vector.multi_reduction <add>, %10, %cst [1, 2] : vector<1x2x8xf32> to vector<1xf32>
    %12 = vector.shape_cast %11 : vector<1xf32> to vector<1x1x1xf32>
    %13 = vector.extract %12[0, 0, 0] : f32 from vector<1x1x1xf32>
    %cst_13 = arith.constant 6.250000e-02 : f32
    %14 = arith.mulf %13, %cst_13 : f32
    %15 = vector.broadcast %14 : f32 to vector<2x8xf32>
    %16 = arith.subf %9, %15 : vector<2x8xf32>
    %17 = arith.mulf %16, %16 : vector<2x8xf32>
    %18 = vector.shape_cast %17 : vector<2x8xf32> to vector<1x2x8xf32>
    %cst_14 = arith.constant dense<0.000000e+00> : vector<1xf32>
    %19 = vector.multi_reduction <add>, %18, %cst_14 [1, 2] : vector<1x2x8xf32> to vector<1xf32>
    %20 = vector.shape_cast %19 : vector<1xf32> to vector<1x1x1xf32>
    %21 = vector.extract %20[0, 0, 0] : f32 from vector<1x1x1xf32>
    %cst_15 = arith.constant 6.250000e-02 : f32
    %22 = arith.mulf %21, %cst_15 : f32
    %cst_16 = arith.constant 9.99999974E-6 : f32
    %23 = arith.addf %22, %cst_16 : f32
    %24 = math.rsqrt %23 : f32
    %25 = arith.mulf %24, %1 : f32
    %26 = vector.broadcast %25 : f32 to vector<2x8xf32>
    %27 = arith.mulf %16, %26 : vector<2x8xf32>
    %28 = vector.broadcast %2 : f32 to vector<2x8xf32>
    %29 = arith.addf %27, %28 : vector<2x8xf32>
    %cst_17 = arith.constant 0.000000e+00 : f32
    %30 = vector.broadcast %cst_17 : f32 to vector<2x8xf32>
    %31 = arith.subf %30, %29 : vector<2x8xf32>
    %32 = math.exp %31 : vector<2x8xf32>
    %cst_18 = arith.constant 1.000000e+00 : f32
    %33 = vector.broadcast %cst_18 : f32 to vector<2x8xf32>
    %34 = arith.addf %33, %32 : vector<2x8xf32>
    %35 = tpu.reciprocal %34 : vector<2x8xf32> -> vector<2x8xf32>
    %cst_19 = arith.constant dense<0.000000e+00> : vector<2xf32>
    %36 = vector.multi_reduction <add>, %35, %cst_19 [1] : vector<2x8xf32> to vector<2xf32>
    %37 = vector.shape_cast %36 : vector<2xf32> to vector<2x1xf32>
    %cst_20 = arith.constant 9.99999993E-9 : f32
    %38 = vector.broadcast %cst_20 : f32 to vector<2x1xf32>
    %39 = arith.addf %37, %38 : vector<2x1xf32>
    %40 = tpu.reciprocal %39 : vector<2x1xf32> -> vector<2x1xf32>
    %41 = vector.broadcast %40 : vector<2x1xf32> to vector<2x8xf32>
    %42 = arith.mulf %35, %41 : vector<2x8xf32>
    %c0_21 = arith.constant 0 : index
    %c0_22 = arith.constant 0 : index
    %43 = vector.load %arg5[%c0_21, %c0_22] : memref<2x8xf32, #tpu.memory_space<vmem>>, vector<2x8xf32>
    tpu.vector_store %arg5[%c0_21, %c0_22], %42 {strides = array<i32>} : memref<2x8xf32, #tpu.memory_space<vmem>>, vector<2x8xf32>,
    %c0_i32_23 = arith.constant 0 : i32
    %c2_i32_24 = arith.constant 2 : i32
    %44 = arith.addi %c0_i32_23, %c2_i32_24 : i32
    %c1_i32_25 = arith.constant 1 : i32
    scf.for %arg7 = %c0_i32_23 to %44 step %c1_i32_25  : i32 {
      %c1_i32_27 = arith.constant 1 : i32
      %45 = arith.muli %arg7, %c1_i32_27 : i32
      %c0_i32_28 = arith.constant 0 : i32
      %46 = arith.addi %c0_i32_28, %45 : i32
      %c1_i32_29 = arith.constant 1 : i32
      %47 = arith.muli %46, %c1_i32_29 : i32
      %48 = arith.index_cast %47 : i32 to index
      %c0_30 = arith.constant 0 : index
      %49 = vector.load %arg5[%48, %c0_30] : memref<2x8xf32, #tpu.memory_space<vmem>>, vector<1x8xf32>
      %50 = arith.index_cast %47 : i32 to index
      %c0_31 = arith.constant 0 : index
      %c0_32 = arith.constant 0 : index
      %51 = vector.load %arg4[%50, %c0_31, %c0_32] : memref<2x8x256xf32, #tpu.memory_space<vmem>>, vector<1x8x256xf32>
      %52 = vector.shape_cast %49 : vector<1x8xf32> to vector<1x1x8xf32>
      "tpu.trace_start"() <{level = 10 : i32, message = "bql,bld->bqd"}> : () -> ()
      %cst_33 = arith.constant dense<0.000000e+00> : vector<1x1x256xf32>
      %53 = tpu.matmul %52, %51, %cst_33 {dimension_numbers = #tpu.dot_dimension_numbers<[2], [1], [1], [2], [0, 0, 0, 1, 1, 2], [0], [0]>, precision = #tpu.contract_precision<fp32>} : vector<1x1x8xf32>, vector<1x8x256xf32>, vector<1x1x256xf32> -> vector<1x1x256xf32>
      "tpu.trace_stop"() : () -> ()
      %54 = arith.mulf %53, %53 : vector<1x1x256xf32>
      %cst_34 = arith.constant dense<0.000000e+00> : vector<1x1xf32>
      %55 = vector.multi_reduction <add>, %54, %cst_34 [2] : vector<1x1x256xf32> to vector<1x1xf32>
      %56 = vector.shape_cast %55 : vector<1x1xf32> to vector<1x1x1xf32>
      %57 = math.sqrt %56 : vector<1x1x1xf32>
      %cst_35 = arith.constant 9.99999993E-9 : f32
      %58 = vector.broadcast %cst_35 : f32 to vector<1x1x1xf32>
      %59 = arith.addf %57, %58 : vector<1x1x1xf32>
      %60 = tpu.reciprocal %59 : vector<1x1x1xf32> -> vector<1x1x1xf32>
      %61 = vector.broadcast %60 : vector<1x1x1xf32> to vector<1x1x256xf32>
      %62 = arith.mulf %53, %61 : vector<1x1x256xf32>
      %63 = vector.shape_cast %62 : vector<1x1x256xf32> to vector<1x256xf32>
      %64 = arith.index_cast %47 : i32 to index
      %c0_36 = arith.constant 0 : index
      %65 = vector.load %arg3[%64, %c0_36] : memref<2x256xf32, #tpu.memory_space<vmem>>, vector<1x256xf32>
      tpu.vector_store %arg3[%64, %c0_36], %63 {strides = array<i32>} : memref<2x256xf32, #tpu.memory_space<vmem>>, vector<1x256xf32>,
    }
    %c2_i32_26 = arith.constant 2 : i32
    return
  }
}

</mosaic_0001>

<llo_original>
// kernel: tpu_custom_call.1
$region0: #{tpu_custom_call.1}
  #allocation0 [shape = 'u32[]', space=smem, size = 0x4, offset = 0x4, fixed_abs, tag = 'smem constant byte address 0x4 - core index']
  #allocation1 [shape = 'u32[144,128]{1,0:T(1,128)}', space=vmem, size = 0x12000, scoped, tag = 'internal scratch']
  #allocation2 [shape = 'f32[2,8,256]{2,1,0:T(8,128)}', space=vmem, size = 0x4000, scoped, tag = 'scratch operand']
  #allocation3 [shape = 'f32[2,8]{1,0:T(2,128)}', space=vmem, size = 0x400, scoped, tag = 'scratch operand']
  #allocation4 [shape = 's32[2]{0}', space=sflag, size = 0x8, scoped, tag = 'scratch operand']
  #allocation9 [shape = 's32[]', space=sflag, size = 0x4, offset = 0, fixed_abs, tag = 'sflag constant byte address 0x0 - dummy sync flag']
  #allocation10 [shape = 's32[]', space=sflag, size = 0x4, offset = 0, fixed_abs, tag = 'sflag constant byte address 0x0 - dummy sync flag']
  #allocation11 [shape = 'u32[]', space=smem, size = 0x4, offset = 0x44, fixed_abs, tag = 'smem constant byte address 0x44 - assertion arg 0']
  #allocation12 [shape = 'u32[]', space=smem, size = 0x4, offset = 0x48, fixed_abs, tag = 'smem constant byte address 0x48 - assertion arg 1']
  #allocation13 [shape = 's32[]', space=sflag, size = 0x4, offset = 0, fixed_abs, tag = 'sflag constant byte address 0x0 - dummy sync flag']
  #allocation14 [shape = 's32[]', space=sflag, size = 0x4, offset = 0, fixed_abs, tag = 'sflag constant byte address 0x0 - dummy sync flag']
  %s0 = inlined_call_operand.hbm [shape: f32[3], index: 0, kind: input, shape index: {}]
  %s1 = inlined_call_operand.hbm [shape: f32[2,8,256], index: 1, kind: input, shape index: {}]
  %s2 = inlined_call_operand.vmem [shape: f32[1,1,256], index: 2, kind: input, shape index: {}]
  %s3 = inlined_call_operand.hbm [shape: f32[2,256], index: 3, kind: output, shape index: {}]
  %s4 = sld [smem:[#allocation0]]
  $region48: #{tpu_custom_call.1} parent=0
    _
  %s6 = ssub.s32 1, %s4
  %s7 = scalar_select 0, %s6, %s4
  $region1: #{tpu_custom_call.1} parent=0
    #allocation5 [shape = 'u8[512]{0}', space=smem, size = 0x200, scoped, tag = 'input window, operand 0, single buffered']
    #allocation6 [shape = 's32[1]{0}', space=sflag, size = 0x4, scoped, tag = 'scoped memory for tpu_custom_call.1']
    #allocation7 [shape = 's32[1]{0}', space=sflag, size = 0x4, scoped, tag = 'scoped memory for tpu_custom_call.1']
    #allocation8 [shape = 'u8[2048]{0}', space=vmem, size = 0x800, scoped, tag = 'output window, operand 0, single buffered']
    %8 = vsyncpa [#allocation7], 0
    %9 = vsyncpa [#allocation6], 0
    // Predicated region
    $region2: #{tpu_custom_call.1} parent=1 // pred_check
      _
    $region3: #{tpu_custom_call.1} parent=1 // pred_check_branch
      %11 = sbr.rel (0) target = $region5
    $region4: #{tpu_custom_call.1} parent=1 // pred_region
      %s13 = ssub.s32 16, 16
      %14 = vsyncadd [#allocation7], %s13
      %17 = dma.hbm_to_smem %s0, 16, [#allocation5], [#allocation7]
    $region5: #{tpu_custom_call.1} parent=1 // pred_fallthru
      _
    // Predicated region
    $region6: #{tpu_custom_call.1} parent=1 // pred_check
      _
    $region7: #{tpu_custom_call.1} parent=1 // pred_check_branch
      %19 = sbr.rel (0) target = $region9
    $region8: #{tpu_custom_call.1} parent=1 // pred_region
      _
    $region9: #{tpu_custom_call.1} parent=1 // pred_fallthru
      _
    // Predicated region
    $region10: #{tpu_custom_call.1} parent=1 // pred_check
      _
    $region11: #{tpu_custom_call.1} parent=1 // pred_check_branch
      %21 = sbr.rel (0) target = $region13
    $region12: #{tpu_custom_call.1} parent=1 // pred_region
      %22 = dma.done [#allocation7], 16
    $region13: #{tpu_custom_call.1} parent=1 // pred_fallthru
      _
    %23 = sfence
    %s24 = sld [smem:[#allocation5]]
    %s25 = sld [smem:[#allocation5 + $0x1]]
    %s26 = sld [smem:[#allocation5 + $0x2]]
    %v27 = vld [vmem:[%s2] sm:$0x3]
    // Predicated region
    $region14: #{tpu_custom_call.1} parent=1 // pred_check
      _
    $region15: #{tpu_custom_call.1} parent=1 // pred_check_branch
      %29 = sbr.rel target = $region17
    $region16: #{tpu_custom_call.1} parent=1 // pred_region
      %30 = sst [smem:[#allocation11]] [#allocation10]
      %31 = sst [smem:[#allocation12]] [#allocation9]
    $region17: #{tpu_custom_call.1} parent=1 // pred_fallthru
      _
    %33 = shalt.err (0)
    %s35 = sshll.u32 [#allocation2], 4
    %s36 = int_to_ptr.vmem [resolvable:$true] %s35
    %38 = dma.hbm_to_vmem [thread:$0]  %s1, 256, %s36, [#allocation4]
    loop: start=0, step=1, limit=2
    $region18: #{tpu_custom_call.1} parent=1 // loop_pre_header
      _
    $region19: #{tpu_custom_call.1} parent=1 // loop_header
      %s40 = sphi 0, %s44
      %p41 = scmp.ge.s32.totalorder %s40, 2
    $region20: #{tpu_custom_call.1} parent=1 // loop_header_branch
      %43 = sbr.rel (%p41) target = $region24
    $region21: #{tpu_custom_call.1} parent=1 // loop_body
      %s45 = smul.u32 %s40, 2
      %s46 = smul.addr %s45, 8
      %s47 = scalar_lea.vmem [#allocation2], %s46
      %s48 = scalar_lea.sflag [#allocation4], %s40
      %s49 = smul.u32 8, 1
      %s50 = smul.u32 %s49, 1
      %s51 = smul.u32 %s50, 2
      %s52 = sshll.u32 %s51, 4
      %53 = dma.done %s48, %s52
      %s54 = sadd.s32 %s40, 1
      %p55 = scmp.lt.s32.totalorder %s54, 2
      // Predicated region
      $region25: #{tpu_custom_call.1} parent=21 // pred_check
        %p56 = pneg %p55
      $region26: #{tpu_custom_call.1} parent=21 // pred_check_branch
        %58 = sbr.rel (%p56) target = $region28
      $region27: #{tpu_custom_call.1} parent=21 // pred_region
        %s59 = smul.u32 %s54, 2
        %s60 = smul.addr %s59, 128
        %s61 = scalar_lea.hbm %s1, %s60
        %s62 = smul.addr %s59, 8
        %s63 = scalar_lea.vmem [#allocation2], %s62
        %s64 = scalar_lea.sflag [#allocation4], %s54
        // Predicated region
        $region29: #{tpu_custom_call.1} parent=27 // pred_check
          _
        $region30: #{tpu_custom_call.1} parent=27 // pred_check_branch
          %66 = sbr.rel target = $region32
        $region31: #{tpu_custom_call.1} parent=27 // pred_region
          %67 = sst [smem:[#allocation11]] [#allocation14]
          %68 = sst [smem:[#allocation12]] [#allocation13]
        $region32: #{tpu_custom_call.1} parent=27 // pred_fallthru
          _
        %70 = shalt.err (0)
        %s72 = sshll.u32 %s63, 4
        %s73 = int_to_ptr.vmem [resolvable:$true] %s72
        %75 = dma.hbm_to_vmem [thread:$0]  %s61, 256, %s73, %s64
      $region28: #{tpu_custom_call.1} parent=21 // pred_fallthru
        _
      %v76 = vld [vmem:[%s47] sm:$0xff]
      %v77 = vld [vmem:[%s47 + $0x8] sm:$0xff]
      %v79 = vlaneseq
      %v80 = vshrl.u32 %v79, 7
      %v81 = vsub.s32 0, %v80
      %v82 = vrot.slane %v27, %v81
      %v83 = vlaneseq
      %v84 = vshrl.u32 %v83, 7
      %v85 = vsub.s32 1, %v84
      %v86 = vrot.slane %v27, %v85
      %v89 = vmul.f32 %v76, %v82
      %v90 = vmul.f32 %v77, %v86
      %v91 = vadd.f32 %v89, %v90
      %92 = vadd.xlane.f32.xlu0 %v91
      %v93 = vpop.xlane.xlu0 %92
      %v94 = vstv %s24
      %v95 = vadd.f32 %v93, %v94
      %v97 = vlaneseq
      %v98 = vand.u32 %v97, 127
      %v99 = vlaneseq
      %v100 = vshrl.u32 %v99, 7
      %v101 = vsub.s32 %v98, %v100
      %v102 = vrot.slane %v95, %v101
      %s104 = scalar_lea.vmem [#allocation3], %s40
      %vm105 = vcmask 57344
      %106 = vst.msk [vmem:[%s104] sm:$0x1] %vm105, %v102
    $region22: #{tpu_custom_call.1} parent=1 // loop_footer
      %s44 = sadd.s32 1, %s40
    $region23: #{tpu_custom_call.1} parent=1 // loop_footer_branch
      %39 = sbr.rel target = $region19
    $region24: #{tpu_custom_call.1} parent=1 // loop_exit
      _
    %v107 = vld [vmem:[#allocation3] sm:$0x3]
    %vm108 = vcmask 58368
    %v109 = vsel %vm108, %v107, 0.0
    %110 = vadd.xlane.f32.xlu0 %v109
    %v111 = vpop.xlane.xlu0 %110
    %v112 = vrot.slane %v111, 4
    %v113 = vadd.f32 %v111, %v112
    %v114 = vrot.slane %v113, 2
    %v115 = vadd.f32 %v113, %v114
    %v116 = vrot.slane %v115, 1
    %v117 = vadd.f32 %v115, %v116
    %s118 = vtos %v117
    %s119 = smul.f32 %s118, 0.0625
    %v120 = vstv %s119
    %v121 = vsub.f32 %v107, %v120
    %v122 = vmul.f32 %v121, %v121
    %v123 = vsel %vm108, %v122, 0.0
    %124 = vadd.xlane.f32.xlu0 %v123
    %v125 = vpop.xlane.xlu0 %124
    %v126 = vrot.slane %v125, 4
    %v127 = vadd.f32 %v125, %v126
    %v128 = vrot.slane %v127, 2
    %v129 = vadd.f32 %v127, %v128
    %v130 = vrot.slane %v129, 1
    %v131 = vadd.f32 %v129, %v130
    %s132 = vtos %v131
    %s133 = smul.f32 %s132, 0.0625
    %s134 = sadd.f32 %s133, 1e-05
    %v135 = vstv %s134
    %v136 = vrsqrt.pop %v135
    %s137 = vtos %v136
    %s138 = smul.f32 %s137, %s25
    %v139 = vstv %s138
    %v140 = vmul.f32 %v121, %v139
    %v141 = vstv %s26
    %v142 = vadd.f32 %v140, %v141
    %v143 = vsub.f32 0.0, %v142
    %v144 = vmul.f32 %v143, 1.442695
    %v145 = vpow.pop %v144
    %v146 = vadd.f32 %v145, 1.0
    %v147 = vrcp.pop %v146
    %v148 = vsel %vm108, %v147, 0.0
    %149 = vadd.xlane.f32.xlu0 %v148
    %v150 = vpop.xlane.xlu0 %149
    %v151 = vadd.f32 %v150, 1e-08
    %v152 = vrcp.pop %v151
    %v153 = vmul.f32 %v147, %v152
    %154 = vst.msk [vmem:[#allocation3] sm:$0x3] %vm108, %v153
    loop: start=0, step=1, limit=2
    $region33: #{tpu_custom_call.1} parent=1 // loop_pre_header
      _
    $region34: #{tpu_custom_call.1} parent=1 // loop_header
      %s156 = sphi 0, %s160
      %p157 = scmp.ge.s32.totalorder %s156, 2
    $region35: #{tpu_custom_call.1} parent=1 // loop_header_branch
      %159 = sbr.rel (%p157) target = $region39
    $region36: #{tpu_custom_call.1} parent=1 // loop_body
      %s161 = scalar_lea.vmem [#allocation3], %s156
      %v162 = vld [vmem:[%s161] sm:$0x1]
      %s163 = smul.u32 %s156, 2
      %s164 = smul.addr %s163, 8
      %s165 = scalar_lea.vmem [#allocation2], %s164
      %v166 = vld [vmem:[%s165] sm:$0xff]
      %v167 = vld [vmem:[%s165 + $0x8] sm:$0xff]
      %vm168 = vcmask 64512
      %v170 = vsel %vm168, %v162, 0
      %v172 = vand.u32 %v167, 4294901760
      %173 = vmatprep.subr.mxu0 %v172
      %v174 = vand.u32 %v166, 4294901760
      %175 = vmatpush1.msra.mxu0 %v174
      %176 = vmatprep.subr.mxu0 0.0
      %177 = vmatpush1.msra.mxu0 0.0
      %178 = vmatprep.subr.mxu0 0.0
      %179 = vmatpush1.msra.mxu0 0.0
      %180 = vmatprep.subr.mxu0 0.0
      %181 = vmatpush1.msra.mxu0 0.0
      %182 = vmatprep.subr.mxu0 0.0
      %183 = vmatpush1.msra.mxu0 0.0
      %184 = vmatprep.subr.mxu0 0.0
      %185 = vmatpush1.msra.mxu0 0.0
      %186 = vmatprep.subr.mxu0 0.0
      %187 = vmatpush1.msra.mxu0 0.0
      %188 = vmatprep.subr.mxu0 0.0
      %189 = vmatpush1.msra.mxu0 0.0
      %190 = vmatprep.subr.mxu0 0.0
      %191 = vmatpush1.msra.mxu0 0.0
      %192 = vmatprep.subr.mxu0 0.0
      %193 = vmatpush1.msra.mxu0 0.0
      %194 = vmatprep.subr.mxu0 0.0
      %195 = vmatpush1.msra.mxu0 0.0
      %196 = vmatprep.subr.mxu0 0.0
      %197 = vmatpush1.msra.mxu0 0.0
      %198 = vmatprep.subr.mxu0 0.0
      %199 = vmatpush1.msra.mxu0 0.0
      %200 = vmatprep.subr.mxu0 0.0
      %201 = vmatpush1.msra.mxu0 0.0
      %202 = vmatprep.subr.mxu0 0.0
      %203 = vmatpush1.msra.mxu0 0.0
      %204 = vmatprep.subr.mxu0 0.0
      %205 = vmatpush1.msra.mxu0 0.0
      %206 = vmatprep.subr.mxu0 0.0
      %207 = vmatpush1.msra.mxu0 0.0
      %208 = vmatprep.subr.mxu0 0.0
      %209 = vmatpush1.msra.mxu0 0.0
      %210 = vmatprep.subr.mxu0 0.0
      %211 = vmatpush1.msra.mxu0 0.0
      %212 = vmatprep.subr.mxu0 0.0
      %213 = vmatpush1.msra.mxu0 0.0
      %214 = vmatprep.subr.mxu0 0.0
      %215 = vmatpush1.msra.mxu0 0.0
      %216 = vmatprep.subr.mxu0 0.0
      %217 = vmatpush1.msra.mxu0 0.0
      %218 = vmatprep.subr.mxu0 0.0
      %219 = vmatpush1.msra.mxu0 0.0
      %220 = vmatprep.subr.mxu0 0.0
      %221 = vmatpush1.msra.mxu0 0.0
      %222 = vmatprep.subr.mxu0 0.0
      %223 = vmatpush1.msra.mxu0 0.0
      %224 = vmatprep.subr.mxu0 0.0
      %225 = vmatpush1.msra.mxu0 0.0
      %226 = vmatprep.subr.mxu0 0.0
      %227 = vmatpush1.msra.mxu0 0.0
      %228 = vmatprep.subr.mxu0 0.0
      %229 = vmatpush1.msra.mxu0 0.0
      %230 = vmatprep.subr.mxu0 0.0
      %231 = vmatpush1.msra.mxu0 0.0
      %232 = vmatprep.subr.mxu0 0.0
      %233 = vmatpush1.msra.mxu0 0.0
      %234 = vmatprep.subr.mxu0 0.0
      %235 = vmatpush1.msra.mxu0 0.0
      %236 = vmatprep.subr.mxu0 0.0
      %237 = vmatpush1.msra.mxu0 0.0
      %238 = vmatprep.mubr.f32.mxu0 0.0
      %v239 = vand.u32 %v170, 4294901760
      %v240 = vsub.f32 %v170, %v239
      %v241 = vand.u32 %v240, 4294901760
      %v242 = vsub.f32 %v240, %v241
      %v243 = vand.u32 %v242, 4294901760
      %244 = vmatmul.mubr.f32.gmra.mrb[0].mxu0 %v243
      %v245 = vpop.f32.mrb[0].mxu0
      %v246 = vadd.f32 0.0, %v245
      %v247 = vpop.f32.mrb[0].mxu0
      %v248 = vadd.f32 0.0, %v247
      %249 = vdwg.mxu0
      %v250 = vand.u32 %v167, 4294901760
      %v251 = vsub.f32 %v167, %v250
      %v252 = vand.u32 %v251, 4294901760
      %v253 = vsub.f32 %v251, %v252
      %v254 = vand.u32 %v253, 4294901760
      %255 = vmatprep.subr.mxu0 %v254
      %v256 = vand.u32 %v166, 4294901760
      %v257 = vsub.f32 %v166, %v256
      %v258 = vand.u32 %v257, 4294901760
      %v259 = vsub.f32 %v257, %v258
      %v260 = vand.u32 %v259, 4294901760
      %261 = vmatpush1.msra.mxu0 %v260
      %262 = vmatprep.subr.mxu0 0.0
      %263 = vmatpush1.msra.mxu0 0.0
      %264 = vmatprep.subr.mxu0 0.0
      %265 = vmatpush1.msra.mxu0 0.0
      %266 = vmatprep.subr.mxu0 0.0
      %267 = vmatpush1.msra.mxu0 0.0
      %268 = vmatprep.subr.mxu0 0.0
      %269 = vmatpush1.msra.mxu0 0.0
      %270 = vmatprep.subr.mxu0 0.0
      %271 = vmatpush1.msra.mxu0 0.0
      %272 = vmatprep.subr.mxu0 0.0
      %273 = vmatpush1.msra.mxu0 0.0
      %274 = vmatprep.subr.mxu0 0.0
      %275 = vmatpush1.msra.mxu0 0.0
      %276 = vmatprep.subr.mxu0 0.0
      %277 = vmatpush1.msra.mxu0 0.0
      %278 = vmatprep.subr.mxu0 0.0
      %279 = vmatpush1.msra.mxu0 0.0
      %280 = vmatprep.subr.mxu0 0.0
      %281 = vmatpush1.msra.mxu0 0.0
      %282 = vmatprep.subr.mxu0 0.0
      %283 = vmatpush1.msra.mxu0 0.0
      %284 = vmatprep.subr.mxu0 0.0
      %285 = vmatpush1.msra.mxu0 0.0
      %286 = vmatprep.subr.mxu0 0.0
      %287 = vmatpush1.msra.mxu0 0.0
      %288 = vmatprep.subr.mxu0 0.0
      %289 = vmatpush1.msra.mxu0 0.0
      %290 = vmatprep.subr.mxu0 0.0
      %291 = vmatpush1.msra.mxu0 0.0
      %292 = vmatprep.subr.mxu0 0.0
      %293 = vmatpush1.msra.mxu0 0.0
      %294 = vmatprep.subr.mxu0 0.0
      %295 = vmatpush1.msra.mxu0 0.0
      %296 = vmatprep.subr.mxu0 0.0
      %297 = vmatpush1.msra.mxu0 0.0
      %298 = vmatprep.subr.mxu0 0.0
      %299 = vmatpush1.msra.mxu0 0.0
      %300 = vmatprep.subr.mxu0 0.0
      %301 = vmatpush1.msra.mxu0 0.0
      %302 = vmatprep.subr.mxu0 0.0
      %303 = vmatpush1.msra.mxu0 0.0
      %304 = vmatprep.subr.mxu0 0.0
      %305 = vmatpush1.msra.mxu0 0.0
      %306 = vmatprep.subr.mxu0 0.0
      %307 = vmatpush1.msra.mxu0 0.0
      %308 = vmatprep.subr.mxu0 0.0
      %309 = vmatpush1.msra.mxu0 0.0
      %310 = vmatprep.subr.mxu0 0.0
      %311 = vmatpush1.msra.mxu0 0.0
      %312 = vmatprep.subr.mxu0 0.0
      %313 = vmatpush1.msra.mxu0 0.0
      %314 = vmatprep.subr.mxu0 0.0
      %315 = vmatpush1.msra.mxu0 0.0
      %316 = vmatprep.subr.mxu0 0.0
      %317 = vmatpush1.msra.mxu0 0.0
      %318 = vmatprep.subr.mxu0 0.0
      %319 = vmatpush1.msra.mxu0 0.0
      %320 = vmatprep.subr.mxu0 0.0
      %321 = vmatpush1.msra.mxu0 0.0
      %322 = vmatprep.subr.mxu0 0.0
      %323 = vmatpush1.msra.mxu0 0.0
      %324 = vmatprep.mubr.f32.mxu0 0.0
      %v325 = vand.u32 %v170, 4294901760
      %326 = vmatmul.mubr.f32.gmra.mrb[0].mxu0 %v325
      %v327 = vpop.f32.mrb[0].mxu0
      %v328 = vadd.f32 %v246, %v327
      %v329 = vpop.f32.mrb[0].mxu0
      %v330 = vadd.f32 %v248, %v329
      %331 = vdwg.mxu0
      %v332 = vand.u32 %v167, 4294901760
      %v333 = vsub.f32 %v167, %v332
      %334 = vmatprep.subr.mxu0 %v333
      %v335 = vand.u32 %v166, 4294901760
      %v336 = vsub.f32 %v166, %v335
      %337 = vmatpush1.msra.mxu0 %v336
      %338 = vmatprep.subr.mxu0 0.0
      %339 = vmatpush1.msra.mxu0 0.0
      %340 = vmatprep.subr.mxu0 0.0
      %341 = vmatpush1.msra.mxu0 0.0
      %342 = vmatprep.subr.mxu0 0.0
      %343 = vmatpush1.msra.mxu0 0.0
      %344 = vmatprep.subr.mxu0 0.0
      %345 = vmatpush1.msra.mxu0 0.0
      %346 = vmatprep.subr.mxu0 0.0
      %347 = vmatpush1.msra.mxu0 0.0
      %348 = vmatprep.subr.mxu0 0.0
      %349 = vmatpush1.msra.mxu0 0.0
      %350 = vmatprep.subr.mxu0 0.0
      %351 = vmatpush1.msra.mxu0 0.0
      %352 = vmatprep.subr.mxu0 0.0
      %353 = vmatpush1.msra.mxu0 0.0
      %354 = vmatprep.subr.mxu0 0.0
      %355 = vmatpush1.msra.mxu0 0.0
      %356 = vmatprep.subr.mxu0 0.0
      %357 = vmatpush1.msra.mxu0 0.0
      %358 = vmatprep.subr.mxu0 0.0
      %359 = vmatpush1.msra.mxu0 0.0
      %360 = vmatprep.subr.mxu0 0.0
      %361 = vmatpush1.msra.mxu0 0.0
      %362 = vmatprep.subr.mxu0 0.0
      %363 = vmatpush1.msra.mxu0 0.0
      %364 = vmatprep.subr.mxu0 0.0
      %365 = vmatpush1.msra.mxu0 0.0
      %366 = vmatprep.subr.mxu0 0.0
      %367 = vmatpush1.msra.mxu0 0.0
      %368 = vmatprep.subr.mxu0 0.0
      %369 = vmatpush1.msra.mxu0 0.0
      %370 = vmatprep.subr.mxu0 0.0
      %371 = vmatpush1.msra.mxu0 0.0
      %372 = vmatprep.subr.mxu0 0.0
      %373 = vmatpush1.msra.mxu0 0.0
      %374 = vmatprep.subr.mxu0 0.0
      %375 = vmatpush1.msra.mxu0 0.0
      %376 = vmatprep.subr.mxu0 0.0
      %377 = vmatpush1.msra.mxu0 0.0
      %378 = vmatprep.subr.mxu0 0.0
      %379 = vmatpush1.msra.mxu0 0.0
      %380 = vmatprep.subr.mxu0 0.0
      %381 = vmatpush1.msra.mxu0 0.0
      %382 = vmatprep.subr.mxu0 0.0
      %383 = vmatpush1.msra.mxu0 0.0
      %384 = vmatprep.subr.mxu0 0.0
      %385 = vmatpush1.msra.mxu0 0.0
      %386 = vmatprep.subr.mxu0 0.0
      %387 = vmatpush1.msra.mxu0 0.0
      %388 = vmatprep.subr.mxu0 0.0
      %389 = vmatpush1.msra.mxu0 0.0
      %390 = vmatprep.subr.mxu0 0.0
      %391 = vmatpush1.msra.mxu0 0.0
      %392 = vmatprep.subr.mxu0 0.0
      %393 = vmatpush1.msra.mxu0 0.0
      %394 = vmatprep.subr.mxu0 0.0
      %395 = vmatpush1.msra.mxu0 0.0
      %396 = vmatprep.subr.mxu0 0.0
      %397 = vmatpush1.msra.mxu0 0.0
      %398 = vmatprep.subr.mxu0 0.0
      %399 = vmatpush1.msra.mxu0 0.0
      %400 = vmatprep.mubr.f32.mxu0 0.0
      %v401 = vand.u32 %v170, 4294901760
      %v402 = vsub.f32 %v170, %v401
      %403 = vmatmul.mubr.f32.gmra.mrb[0].mxu0 %v402
      %v404 = vpop.f32.mrb[0].mxu0
      %v405 = vadd.f32 %v328, %v404
      %v406 = vpop.f32.mrb[0].mxu0
      %v407 = vadd.f32 %v330, %v406
      %408 = vdwg.mxu0
      %v409 = vand.u32 %v167, 4294901760
      %410 = vmatprep.subr.mxu0 %v409
      %v411 = vand.u32 %v166, 4294901760
      %412 = vmatpush1.msra.mxu0 %v411
      %413 = vmatprep.subr.mxu0 0.0
      %414 = vmatpush1.msra.mxu0 0.0
      %415 = vmatprep.subr.mxu0 0.0
      %416 = vmatpush1.msra.mxu0 0.0
      %417 = vmatprep.subr.mxu0 0.0
      %418 = vmatpush1.msra.mxu0 0.0
      %419 = vmatprep.subr.mxu0 0.0
      %420 = vmatpush1.msra.mxu0 0.0
      %421 = vmatprep.subr.mxu0 0.0
      %422 = vmatpush1.msra.mxu0 0.0
      %423 = vmatprep.subr.mxu0 0.0
      %424 = vmatpush1.msra.mxu0 0.0
      %425 = vmatprep.subr.mxu0 0.0
      %426 = vmatpush1.msra.mxu0 0.0
      %427 = vmatprep.subr.mxu0 0.0
      %428 = vmatpush1.msra.mxu0 0.0
      %429 = vmatprep.subr.mxu0 0.0
      %430 = vmatpush1.msra.mxu0 0.0
      %431 = vmatprep.subr.mxu0 0.0
      %432 = vmatpush1.msra.mxu0 0.0
      %433 = vmatprep.subr.mxu0 0.0
      %434 = vmatpush1.msra.mxu0 0.0
      %435 = vmatprep.subr.mxu0 0.0
      %436 = vmatpush1.msra.mxu0 0.0
      %437 = vmatprep.subr.mxu0 0.0
      %438 = vmatpush1.msra.mxu0 0.0
      %439 = vmatprep.subr.mxu0 0.0
      %440 = vmatpush1.msra.mxu0 0.0
      %441 = vmatprep.subr.mxu0 0.0
      %442 = vmatpush1.msra.mxu0 0.0
      %443 = vmatprep.subr.mxu0 0.0
      %444 = vmatpush1.msra.mxu0 0.0
      %445 = vmatprep.subr.mxu0 0.0
      %446 = vmatpush1.msra.mxu0 0.0
      %447 = vmatprep.subr.mxu0 0.0
      %448 = vmatpush1.msra.mxu0 0.0
      %449 = vmatprep.subr.mxu0 0.0
      %450 = vmatpush1.msra.mxu0 0.0
      %451 = vmatprep.subr.mxu0 0.0
      %452 = vmatpush1.msra.mxu0 0.0
      %453 = vmatprep.subr.mxu0 0.0
      %454 = vmatpush1.msra.mxu0 0.0
      %455 = vmatprep.subr.mxu0 0.0
      %456 = vmatpush1.msra.mxu0 0.0
      %457 = vmatprep.subr.mxu0 0.0
      %458 = vmatpush1.msra.mxu0 0.0
      %459 = vmatprep.subr.mxu0 0.0
      %460 = vmatpush1.msra.mxu0 0.0
      %461 = vmatprep.subr.mxu0 0.0
      %462 = vmatpush1.msra.mxu0 0.0
      %463 = vmatprep.subr.mxu0 0.0
      %464 = vmatpush1.msra.mxu0 0.0
      %465 = vmatprep.subr.mxu0 0.0
      %466 = vmatpush1.msra.mxu0 0.0
      %467 = vmatprep.subr.mxu0 0.0
      %468 = vmatpush1.msra.mxu0 0.0
      %469 = vmatprep.subr.mxu0 0.0
      %470 = vmatpush1.msra.mxu0 0.0
      %471 = vmatprep.subr.mxu0 0.0
      %472 = vmatpush1.msra.mxu0 0.0
      %473 = vmatprep.subr.mxu0 0.0
      %474 = vmatpush1.msra.mxu0 0.0
      %475 = vmatprep.mubr.f32.mxu0 0.0
      %v476 = vand.u32 %v170, 4294901760
      %v477 = vsub.f32 %v170, %v476
      %v478 = vand.u32 %v477, 4294901760
      %479 = vmatmul.mubr.f32.gmra.mrb[0].mxu0 %v478
      %v480 = vpop.f32.mrb[0].mxu0
      %v481 = vadd.f32 %v405, %v480
      %v482 = vpop.f32.mrb[0].mxu0
      %v483 = vadd.f32 %v407, %v482
      %484 = vdwg.mxu0
      %v485 = vand.u32 %v167, 4294901760
      %v486 = vsub.f32 %v167, %v485
      %v487 = vand.u32 %v486, 4294901760
      %488 = vmatprep.subr.mxu0 %v487
      %v489 = vand.u32 %v166, 4294901760
      %v490 = vsub.f32 %v166, %v489
      %v491 = vand.u32 %v490, 4294901760
      %492 = vmatpush1.msra.mxu0 %v491
      %493 = vmatprep.subr.mxu0 0.0
      %494 = vmatpush1.msra.mxu0 0.0
      %495 = vmatprep.subr.mxu0 0.0
      %496 = vmatpush1.msra.mxu0 0.0
      %497 = vmatprep.subr.mxu0 0.0
      %498 = vmatpush1.msra.mxu0 0.0
      %499 = vmatprep.subr.mxu0 0.0
      %500 = vmatpush1.msra.mxu0 0.0
      %501 = vmatprep.subr.mxu0 0.0
      %502 = vmatpush1.msra.mxu0 0.0
      %503 = vmatprep.subr.mxu0 0.0
      %504 = vmatpush1.msra.mxu0 0.0
      %505 = vmatprep.subr.mxu0 0.0
      %506 = vmatpush1.msra.mxu0 0.0
      %507 = vmatprep.subr.mxu0 0.0
      %508 = vmatpush1.msra.mxu0 0.0
      %509 = vmatprep.subr.mxu0 0.0
      %510 = vmatpush1.msra.mxu0 0.0
      %511 = vmatprep.subr.mxu0 0.0
      %512 = vmatpush1.msra.mxu0 0.0
      %513 = vmatprep.subr.mxu0 0.0
      %514 = vmatpush1.msra.mxu0 0.0
      %515 = vmatprep.subr.mxu0 0.0
      %516 = vmatpush1.msra.mxu0 0.0
      %517 = vmatprep.subr.mxu0 0.0
      %518 = vmatpush1.msra.mxu0 0.0
      %519 = vmatprep.subr.mxu0 0.0
      %520 = vmatpush1.msra.mxu0 0.0
      %521 = vmatprep.subr.mxu0 0.0
      %522 = vmatpush1.msra.mxu0 0.0
      %523 = vmatprep.subr.mxu0 0.0
      %524 = vmatpush1.msra.mxu0 0.0
      %525 = vmatprep.subr.mxu0 0.0
      %526 = vmatpush1.msra.mxu0 0.0
      %527 = vmatprep.subr.mxu0 0.0
      %528 = vmatpush1.msra.mxu0 0.0
      %529 = vmatprep.subr.mxu0 0.0
      %530 = vmatpush1.msra.mxu0 0.0
      %531 = vmatprep.subr.mxu0 0.0
      %532 = vmatpush1.msra.mxu0 0.0
      %533 = vmatprep.subr.mxu0 0.0
      %534 = vmatpush1.msra.mxu0 0.0
      %535 = vmatprep.subr.mxu0 0.0
      %536 = vmatpush1.msra.mxu0 0.0
      %537 = vmatprep.subr.mxu0 0.0
      %538 = vmatpush1.msra.mxu0 0.0
      %539 = vmatprep.subr.mxu0 0.0
      %540 = vmatpush1.msra.mxu0 0.0
      %541 = vmatprep.subr.mxu0 0.0
      %542 = vmatpush1.msra.mxu0 0.0
      %543 = vmatprep.subr.mxu0 0.0
      %544 = vmatpush1.msra.mxu0 0.0
      %545 = vmatprep.subr.mxu0 0.0
      %546 = vmatpush1.msra.mxu0 0.0
      %547 = vmatprep.subr.mxu0 0.0
      %548 = vmatpush1.msra.mxu0 0.0
      %549 = vmatprep.subr.mxu0 0.0
      %550 = vmatpush1.msra.mxu0 0.0
      %551 = vmatprep.subr.mxu0 0.0
      %552 = vmatpush1.msra.mxu0 0.0
      %553 = vmatprep.subr.mxu0 0.0
      %554 = vmatpush1.msra.mxu0 0.0
      %555 = vmatprep.mubr.f32.mxu0 0.0
      %v556 = vand.u32 %v170, 4294901760
      %557 = vmatmul.mubr.f32.gmra.mrb[0].mxu0 %v556
      %v558 = vpop.f32.mrb[0].mxu0
      %v559 = vadd.f32 %v481, %v558
      %v560 = vpop.f32.mrb[0].mxu0
      %v561 = vadd.f32 %v483, %v560
      %562 = vdwg.mxu0
      %v563 = vand.u32 %v167, 4294901760
      %564 = vmatprep.subr.mxu0 %v563
      %v565 = vand.u32 %v166, 4294901760
      %566 = vmatpush1.msra.mxu0 %v565
      %567 = vmatprep.subr.mxu0 0.0
      %568 = vmatpush1.msra.mxu0 0.0
      %569 = vmatprep.subr.mxu0 0.0
      %570 = vmatpush1.msra.mxu0 0.0
      %571 = vmatprep.subr.mxu0 0.0
      %572 = vmatpush1.msra.mxu0 0.0
      %573 = vmatprep.subr.mxu0 0.0
      %574 = vmatpush1.msra.mxu0 0.0
      %575 = vmatprep.subr.mxu0 0.0
      %576 = vmatpush1.msra.mxu0 0.0
      %577 = vmatprep.subr.mxu0 0.0
      %578 = vmatpush1.msra.mxu0 0.0
      %579 = vmatprep.subr.mxu0 0.0
      %580 = vmatpush1.msra.mxu0 0.0
      %581 = vmatprep.subr.mxu0 0.0
      %582 = vmatpush1.msra.mxu0 0.0
      %583 = vmatprep.subr.mxu0 0.0
      %584 = vmatpush1.msra.mxu0 0.0
      %585 = vmatprep.subr.mxu0 0.0
      %586 = vmatpush1.msra.mxu0 0.0
      %587 = vmatprep.subr.mxu0 0.0
      %588 = vmatpush1.msra.mxu0 0.0
      %589 = vmatprep.subr.mxu0 0.0
      %590 = vmatpush1.msra.mxu0 0.0
      %591 = vmatprep.subr.mxu0 0.0
      %592 = vmatpush1.msra.mxu0 0.0
      %593 = vmatprep.subr.mxu0 0.0
      %594 = vmatpush1.msra.mxu0 0.0
      %595 = vmatprep.subr.mxu0 0.0
      %596 = vmatpush1.msra.mxu0 0.0
      %597 = vmatprep.subr.mxu0 0.0
      %598 = vmatpush1.msra.mxu0 0.0
      %599 = vmatprep.subr.mxu0 0.0
      %600 = vmatpush1.msra.mxu0 0.0
      %601 = vmatprep.subr.mxu0 0.0
      %602 = vmatpush1.msra.mxu0 0.0
      %603 = vmatprep.subr.mxu0 0.0
      %604 = vmatpush1.msra.mxu0 0.0
      %605 = vmatprep.subr.mxu0 0.0
      %606 = vmatpush1.msra.mxu0 0.0
      %607 = vmatprep.subr.mxu0 0.0
      %608 = vmatpush1.msra.mxu0 0.0
      %609 = vmatprep.subr.mxu0 0.0
      %610 = vmatpush1.msra.mxu0 0.0
      %611 = vmatprep.subr.mxu0 0.0
      %612 = vmatpush1.msra.mxu0 0.0
      %613 = vmatprep.subr.mxu0 0.0
      %614 = vmatpush1.msra.mxu0 0.0
      %615 = vmatprep.subr.mxu0 0.0
      %616 = vmatpush1.msra.mxu0 0.0
      %617 = vmatprep.subr.mxu0 0.0
      %618 = vmatpush1.msra.mxu0 0.0
      %619 = vmatprep.subr.mxu0 0.0
      %620 = vmatpush1.msra.mxu0 0.0
      %621 = vmatprep.subr.mxu0 0.0
      %622 = vmatpush1.msra.mxu0 0.0
      %623 = vmatprep.subr.mxu0 0.0
      %624 = vmatpush1.msra.mxu0 0.0
      %625 = vmatprep.subr.mxu0 0.0
      %626 = vmatpush1.msra.mxu0 0.0
      %627 = vmatprep.subr.mxu0 0.0
      %628 = vmatpush1.msra.mxu0 0.0
      %629 = vmatprep.mubr.f32.mxu0 0.0
      %v630 = vand.u32 %v170, 4294901760
      %631 = vmatmul.mubr.f32.gmra.mrb[0].mxu0 %v630
      %v632 = vpop.f32.mrb[0].mxu0
      %v633 = vadd.f32 %v559, %v632
      %v634 = vpop.f32.mrb[0].mxu0
      %v635 = vadd.f32 %v561, %v634
      %636 = vdwg.mxu0
      %v637 = vmul.f32 %v633, %v633
      %v638 = vmul.f32 %v635, %v635
      %vm639 = vcmask 1040384
      %v640 = vsel %vm639, %v637, 0.0
      %v641 = vsel %vm639, %v638, 0.0
      %v642 = vadd.f32 %v640, %v641
      %643 = vadd.xlane.f32.xlu0 %v642
      %v644 = vpop.xlane.xlu0 %643
      %v645 = vrsqrt.pop %v644
      %v646 = vmul.f32 %v644, %v645
      %vm647 = vcmp.eq.f32.partialorder %v644, inf
      %v648 = vsel %vm647, %v644, %v646
      %vm649 = vcmp.eq.f32.partialorder %v644, 0.0
      %v650 = vand.u32 %v644, 2147483648
      %v651 = vsel %vm649, %v650, %v648
      %v652 = vadd.f32 %v651, 1e-08
      %v653 = vrcp.pop %v652
      %v654 = vmul.f32 %v633, %v653
      %v655 = vmul.f32 %v635, %v653
      %v658 = vcombine.low %v654, %v655
      %v660 = vunpack.c.l.s4 1966171168
      %v661 = vunpack.c.0.s8 %v660
      %v662 = vlaneseq
      %v663 = vshrl.u32 %v662, 7
      %v664 = vsub.s32 %v661, %v663
      %v665 = vrot.slane %v658, %v664
      %v667 = vunpack.c.l.s4 1966171168
      %v668 = vunpack.c.0.s8 %v667
      %v669 = vlaneseq
      %v670 = vshrl.u32 %v669, 7
      %v671 = vsub.s32 %v668, %v670
      %v672 = vrot.slane %v665, %v671
      %v674 = vlaneseq
      %vm675 = vcmp.ge.s32.totalorder %v674, 0
      %vm676 = vcmp.lt.s32.totalorder %v674, 256
      %vm677 = vmand %vm675, %vm676
      %s678 = sshra.s32 %s156, 1
      %s679 = sand.u32 %s156, 1
      %s680 = sshra.s32 %s156, 1
      %s681 = sand.u32 %s156, 1
      %s682 = smul.u32 %s678, 2
      %s683 = smul.u32 %s682, 2
      %s684 = sadd.s32 %s683, %s681
      %s685 = scalar_lea.vmem [#allocation8], %s684
      %686 = vst.msk [vmem:[%s685] ss:$2 sm:$0x3] %vm677, %v672
    $region37: #{tpu_custom_call.1} parent=1 // loop_footer
      %s160 = sadd.s32 1, %s156
    $region38: #{tpu_custom_call.1} parent=1 // loop_footer_branch
      %155 = sbr.rel target = $region34
    $region39: #{tpu_custom_call.1} parent=1 // loop_exit
      _
    // Predicated region
    $region40: #{tpu_custom_call.1} parent=1 // pred_check
      _
    $region41: #{tpu_custom_call.1} parent=1 // pred_check_branch
      %688 = sbr.rel (0) target = $region43
    $region42: #{tpu_custom_call.1} parent=1 // pred_region
      %s690 = ssub.s32 64, 64
      %691 = vsyncadd [#allocation6], %s690
      %s693 = sshll.u32 [#allocation8], 4
      %s694 = int_to_ptr.vmem [resolvable:$true] %s693
      %696 = dma.vmem_to_hbm [thread:$0]  %s694, 64, %s3, [#allocation6]
    $region43: #{tpu_custom_call.1} parent=1 // pred_fallthru
      _
    // Predicated region
    $region44: #{tpu_custom_call.1} parent=1 // pred_check
      _
    $region45: #{tpu_custom_call.1} parent=1 // pred_check_branch
      %698 = sbr.rel (0) target = $region47
    $region46: #{tpu_custom_call.1} parent=1 // pred_region
      %699 = dma.done [#allocation6], 64
    $region47: #{tpu_custom_call.1} parent=1 // pred_fallthru
      _
    %700 = vsyncpa [#allocation6], 1
    %701 = vsyncpa [#allocation7], 1
  %702 = vsyncmov [#allocation4]
  %s703 = vpop.sfrf %702
  %p704 = scmp.eq.s32.totalorder %s703, 0
  %p705 = pneg %p704
  %707 = shalt.err (%p705)
  %s708 = scalar_lea.sflag [#allocation4], 1
  %709 = vsyncmov %s708
  %s710 = vpop.sfrf %709
  %p711 = scmp.eq.s32.totalorder %s710, 0
  %p712 = pneg %p711
  %714 = shalt.err (%p712)

</llo_original>
